<compile_context>
chip_gen: v7x
topology: tpu7x:2x2x1
jax: 0.10.0
libtpu: 0.0.40
codegen_flags: <defaults>
</compile_context>

<pallas_src>
import jax
import jax.numpy as jnp
from jax.experimental import pallas as pl
from jax.experimental.pallas import tpu as pltpu

# cfg.TRANS_HEAD.OUTPUT_DIM — translation regression (x, y, z)
TRANS_OUTPUT_DIM = 3
# Pad output columns only to the sublane granule (8), not a full 128 lanes:
# the kernel is HBM-writeback bound, so narrow (masked) stores win.
OUT_PAD = 8
# Big row tile: amortizes ~0.35 us per-grid-step overhead.
LARGE_N_TILE = 4096
# Below this N, a pallas_call is pure launch overhead; use plain jnp.dot.
SMALL_N_THRESHOLD = 1024


def _round_up(v, m):
    return ((v + m - 1) // m) * m


def _linear_kernel(x_ref, wt_ref, b_ref, o_ref):
    # x_ref : (TM, C)       VMEM
    # wt_ref: (C, OUT_PAD)  VMEM  (weight pre-transposed + zero-padded)
    # b_ref : (1, OUT_PAD)  VMEM  (bias zero-padded)
    # o_ref : (TM, OUT_PAD) VMEM  (narrow output block)
    o_ref[...] = (
        jnp.dot(x_ref[...], wt_ref[...], preferred_element_type=jnp.float32)
        + b_ref[...]
    ).astype(o_ref.dtype)


def prepare_params(weight, bias, out_pad=OUT_PAD):
    """One-time parameter prep (do NOT call per forward).

    weight: (OUT, C) PyTorch nn.Linear layout
    bias  : (OUT,)
    returns wt_pad: (C, out_pad), b_pad: (1, out_pad) — transposed + zero-padded,
    so no per-call transpose is needed and padded lanes contribute zeros.
    """
    out_dim, c = weight.shape
    assert out_dim <= out_pad
    wt_pad = jnp.zeros((c, out_pad), weight.dtype).at[:, :out_dim].set(weight.T)
    b_pad = jnp.zeros((1, out_pad), bias.dtype).at[0, :out_dim].set(bias)
    return wt_pad, b_pad


def car_trans_outputs_forward(x, wt_pad, b_pad, out_dim=TRANS_OUTPUT_DIM,
                              force_pallas=False):
    """Pallas equivalent of car_trans_outputs.forward.

    x      : (N, C) or (N, C, 1, 1)  float32
    wt_pad : (C, OUT_PAD)            float32   (from prepare_params)
    b_pad  : (1, OUT_PAD)            float32   (from prepare_params)
    returns: (N, out_dim)            float32
    """
    if x.ndim == 4:
        assert x.shape[2] == 1 and x.shape[3] == 1
        # Contiguous (N, C, 1, 1): reshape is free, unlike a strided slice.
        x = jnp.reshape(x, (x.shape[0], x.shape[1]))

    n, c = x.shape
    out_pad = wt_pad.shape[1]

    # Small-N fast path: the math is a few hundred FLOPs; let XLA fuse it.
    if n < SMALL_N_THRESHOLD and not force_pallas:
        return x @ wt_pad[:, :out_dim] + b_pad[0, :out_dim]

    # Row tile: as large as worthwhile (step-overhead amortization), but split
    # in two when possible so v7x's 2 TensorCores both get work under
    # dimension_semantics=("parallel",).  No wrapper-side padding of x: Pallas
    # handles the partial last block; rows past n are never written back.
    tm = min(LARGE_N_TILE, max(8, _round_up(pl.cdiv(n, 2), 8)))
    grid = (pl.cdiv(n, tm),)

    out = pl.pallas_call(
        _linear_kernel,
        out_shape=jax.ShapeDtypeStruct((n, out_pad), jnp.float32),
        grid_spec=pltpu.PrefetchScalarGridSpec(
            num_scalar_prefetch=0,
            grid=grid,
            in_specs=[
                pl.BlockSpec((tm, c), lambda i: (i, 0)),
                pl.BlockSpec((c, out_pad), lambda i: (0, 0)),
                pl.BlockSpec((1, out_pad), lambda i: (0, 0)),
            ],
            out_specs=pl.BlockSpec((tm, out_pad), lambda i: (i, 0)),
        ),
        compiler_params=pltpu.CompilerParams(
            # N axis is independent per tile -> shard across v7x's 2 TCs.
            dimension_semantics=("parallel",),
        ),
        cost_estimate=pl.CostEstimate(
            flops=2 * n * c * out_pad,
            bytes_accessed=4 * (n * c + c * out_pad + n * out_pad),
            transcendentals=0,
        ),
    )(x, wt_pad, b_pad)

    # Strip the zero-padded output columns.
    return out[:, :out_dim]


def init_params(key, dim_in, out_dim=TRANS_OUTPUT_DIM):
    """Deterministic init matching _init_weights: W ~ N(0, 0.1), b = 0."""
    w_key, _ = jax.random.split(key)
    weight = 0.1 * jax.random.normal(w_key, (out_dim, dim_in), dtype=jnp.float32)
    bias = jnp.zeros((out_dim,), dtype=jnp.float32)
    return weight, bias


if __name__ == "__main__":
    key = jax.random.PRNGKey(0)
    k_x, k_x2, k_p = jax.random.split(key, 3)

    C = 32  # dim_in
    weight, bias = init_params(k_p, dim_in=C)
    # One-time parameter prep (transpose + 8-lane padding).
    wt_pad, b_pad = prepare_params(weight, bias)

    # 1) Production-like small shape (N, C, 1, 1): uses the fused jnp.dot fast path.
    N_small = 2
    x4 = jax.random.normal(k_x, (N_small, C, 1, 1), dtype=jnp.float32)
    out_small = jax.block_until_ready(
        car_trans_outputs_forward(x4, wt_pad, b_pad))
    ref_small = x4[:, :, 0, 0] @ weight.T + bias
    assert out_small.shape == (N_small, TRANS_OUTPUT_DIM)
    assert jnp.allclose(out_small, ref_small, atol=1e-5, rtol=1e-5)

    # 2) Exercise the Pallas kernel itself (ragged N -> partial last block,
    #    grid length 2 for dual-TC sharding).
    N_big = 200
    x2 = jax.random.normal(k_x2, (N_big, C), dtype=jnp.float32)
    out_big = jax.block_until_ready(
        car_trans_outputs_forward(x2, wt_pad, b_pad, force_pallas=True))
    ref_big = x2 @ weight.T + bias
    assert out_big.shape == (N_big, TRANS_OUTPUT_DIM)
    assert jnp.allclose(out_big, ref_big, atol=1e-5, rtol=1e-5)

    print("KERNEL_OK")
</pallas_src>

<mosaic_0001>
module attributes {stable_mosaic.version = 11 : i64} {
  func.func @_linear_kernel(%arg0: i32, %arg1: memref<104x32xf32, #tpu.memory_space<vmem>>, %arg2: memref<32x8xf32, #tpu.memory_space<vmem>>, %arg3: memref<1x8xf32, #tpu.memory_space<vmem>>, %arg4: memref<104x8xf32, #tpu.memory_space<vmem>>) attributes {dimension_semantics = [#tpu.dimension_semantics<parallel>], iteration_bounds = array<i64: 2>, scalar_prefetch = 0 : i64, scratch_operands = 0 : i64, tpu.core_type = #tpu.core_type<tc>, window_params = [{transform_indices = @transform_0, window_bounds = array<i64: 104, 32>}, {pipeline_mode = #tpu.pipeline_mode<synchronous>, transform_indices = @transform_1, window_bounds = array<i64: 32, 8>}, {pipeline_mode = #tpu.pipeline_mode<synchronous>, transform_indices = @transform_2, window_bounds = array<i64: 1, 8>}, {transform_indices = @transform_3, window_bounds = array<i64: 104, 8>}]} {
    %c0 = arith.constant 0 : index
    %c0_0 = arith.constant 0 : index
    %0 = vector.load %arg1[%c0, %c0_0] : memref<104x32xf32, #tpu.memory_space<vmem>>, vector<104x32xf32>
    %c0_1 = arith.constant 0 : index
    %c0_2 = arith.constant 0 : index
    %1 = vector.load %arg2[%c0_1, %c0_2] : memref<32x8xf32, #tpu.memory_space<vmem>>, vector<32x8xf32>
    %cst = arith.constant dense<0.000000e+00> : vector<104x8xf32>
    %2 = tpu.matmul %0, %1, %cst {dimension_numbers = #tpu.dot_dimension_numbers<[1], [0], [0], [1], [0, 0, 1, 1], [], []>} : vector<104x32xf32>, vector<32x8xf32>, vector<104x8xf32> -> vector<104x8xf32>
    %c0_3 = arith.constant 0 : index
    %c0_4 = arith.constant 0 : index
    %3 = vector.load %arg3[%c0_3, %c0_4] : memref<1x8xf32, #tpu.memory_space<vmem>>, vector<1x8xf32>
    %4 = vector.broadcast %3 : vector<1x8xf32> to vector<104x8xf32>
    %5 = arith.addf %2, %4 : vector<104x8xf32>
    %c0_5 = arith.constant 0 : index
    %c0_6 = arith.constant 0 : index
    %6 = vector.load %arg4[%c0_5, %c0_6] : memref<104x8xf32, #tpu.memory_space<vmem>>, vector<104x8xf32>
    tpu.vector_store %arg4[%c0_5, %c0_6], %5 {strides = array<i32>} : memref<104x8xf32, #tpu.memory_space<vmem>>, vector<104x8xf32>,
    return
  }
  func.func @transform_0(%arg0: i32) -> (i32, i32) {
    %c0_i32 = arith.constant 0 : i32
    %c0_i32_0 = arith.constant 0 : i32
    return %arg0, %c0_i32 : i32, i32
  }
  func.func @transform_1(%arg0: i32) -> (i32, i32) {
    %c0_i32 = arith.constant 0 : i32
    %c0_i32_0 = arith.constant 0 : i32
    %c0_i32_1 = arith.constant 0 : i32
    return %c0_i32, %c0_i32_0 : i32, i32
  }
  func.func @transform_2(%arg0: i32) -> (i32, i32) {
    %c0_i32 = arith.constant 0 : i32
    %c0_i32_0 = arith.constant 0 : i32
    %c0_i32_1 = arith.constant 0 : i32
    return %c0_i32, %c0_i32_0 : i32, i32
  }
  func.func @transform_3(%arg0: i32) -> (i32, i32) {
    %c0_i32 = arith.constant 0 : i32
    %c0_i32_0 = arith.constant 0 : i32
    return %arg0, %c0_i32 : i32, i32
  }
}

</mosaic_0001>

<llo_original>
// kernel: tpu_custom_call.1
$region0: #{tpu_custom_call.1}
  #allocation0 [shape = 'u32[]', space=smem, size = 0x4, offset = 0x4, fixed_abs, tag = 'smem constant byte address 0x4 - core index']
  #allocation1 [shape = 'u32[144,128]{1,0:T(1,128)}', space=vmem, size = 0x12000, scoped, tag = 'internal scratch']
  %s0 = inlined_call_operand.vmem [shape: f32[200,32], index: 0, kind: input, shape index: {}]
  %s1 = inlined_call_operand.vmem [shape: f32[32,8], index: 1, kind: input, shape index: {}]
  %s2 = inlined_call_operand.vmem [shape: f32[1,8], index: 2, kind: input, shape index: {}]
  %s3 = inlined_call_operand.vmem [shape: f32[200,8], index: 3, kind: output, shape index: {}]
  %s4 = sld [smem:[#allocation0]]
  $region93: #{tpu_custom_call.1} parent=0
    _
  %s6 = ssub.s32 1, %s4
  %s7 = scalar_select 0, %s6, %s4
  $region1: #{tpu_custom_call.1} parent=0
    #allocation2 [shape = 'u8[106496]{0}', space=vmem, size = 0x1a000, scoped, tag = 'output window, operand 0']
    loop: start=0, step=1, limit=4
    $region2: #{tpu_custom_call.1} parent=1 // loop_pre_header
      _
    $region3: #{tpu_custom_call.1} parent=1 // loop_header
      %s9 = sphi 0, %s13
      %p10 = scmp.ge.s32.totalorder %s9, 4
      %s19 = sphi 0, %s21
      %s22 = sphi 0, %s19
      %s23 = sphi 0, %s22
      %s39 = sphi 0, %s23
      %s43 = sphi 0, %s43
      %s45 = sphi 0, %s43
      %s46 = sphi 0, %s45
      %s60 = sphi 0, %s46
      %s64 = sphi 0, %s64
      %s66 = sphi 0, %s64
      %s67 = sphi 0, %s66
      %s81 = sphi 0, %s67
      %s87 = sphi 0, %s89
      %s90 = sphi 0, %s87
      %s91 = sphi 0, %s90
      %s107 = sphi 0, %s91
    $region4: #{tpu_custom_call.1} parent=1 // loop_header_branch
      %12 = sbr.rel (%p10) target = $region8
    $region5: #{tpu_custom_call.1} parent=1 // loop_body
      %s14 = ssub.s32 %s9, 1
      %s15 = ssub.s32 %s9, 2
      %s16 = sadd.s32 %s9, 1
      %s17 = ssub.s32 %s9, %s16
      %p18 = scmp.eq.s32.totalorder %s17, 0
      %s20 = sadd.s32 %s19, 1
      %s21 = scalar_select %p18, %s19, %s20
      %p24 = pneg %p18
      %p25 = scmp.eq.s32.totalorder %s9, 1
      %p26 = por %p24, %p25
      %p27 = scmp.ne.s32.totalorder %s19, %s22
      %p28 = scmp.eq.s32.totalorder %s9, 0
      %p29 = por %p27, %p28
      %p30 = scmp.ne.s32.totalorder %s19, %s22
      %p31 = scmp.eq.s32.totalorder %s14, 1
      %p32 = por %p30, %p31
      %p33 = scmp.ne.s32.totalorder %s22, %s23
      %p34 = scmp.eq.s32.totalorder %s14, 0
      %p35 = por %p33, %p34
      %p36 = scmp.ne.s32.totalorder %s22, %s23
      %p37 = scmp.eq.s32.totalorder %s15, 1
      %p38 = por %p36, %p37
      %p40 = scmp.ne.s32.totalorder %s23, %s39
      %p41 = scmp.eq.s32.totalorder %s15, 0
      %p42 = por %p40, %p41
      %s44 = sadd.s32 %s43, 1
      %p47 = scmp.eq.s32.totalorder %s9, 1
      %p48 = scmp.ne.s32.totalorder %s43, %s45
      %p49 = scmp.eq.s32.totalorder %s9, 0
      %p50 = por %p48, %p49
      %p51 = scmp.ne.s32.totalorder %s43, %s45
      %p52 = scmp.eq.s32.totalorder %s14, 1
      %p53 = por %p51, %p52
      %p54 = scmp.ne.s32.totalorder %s45, %s46
      %p55 = scmp.eq.s32.totalorder %s14, 0
      %p56 = por %p54, %p55
      %p57 = scmp.ne.s32.totalorder %s45, %s46
      %p58 = scmp.eq.s32.totalorder %s15, 1
      %p59 = por %p57, %p58
      %p61 = scmp.ne.s32.totalorder %s46, %s60
      %p62 = scmp.eq.s32.totalorder %s15, 0
      %p63 = por %p61, %p62
      %s65 = sadd.s32 %s64, 1
      %p68 = scmp.eq.s32.totalorder %s9, 1
      %p69 = scmp.ne.s32.totalorder %s64, %s66
      %p70 = scmp.eq.s32.totalorder %s9, 0
      %p71 = por %p69, %p70
      %p72 = scmp.ne.s32.totalorder %s64, %s66
      %p73 = scmp.eq.s32.totalorder %s14, 1
      %p74 = por %p72, %p73
      %p75 = scmp.ne.s32.totalorder %s66, %s67
      %p76 = scmp.eq.s32.totalorder %s14, 0
      %p77 = por %p75, %p76
      %p78 = scmp.ne.s32.totalorder %s66, %s67
      %p79 = scmp.eq.s32.totalorder %s15, 1
      %p80 = por %p78, %p79
      %p82 = scmp.ne.s32.totalorder %s67, %s81
      %p83 = scmp.eq.s32.totalorder %s15, 0
      %p84 = por %p82, %p83
      %s85 = ssub.s32 %s9, %s16
      %p86 = scmp.eq.s32.totalorder %s85, 0
      %s88 = sadd.s32 %s87, 1
      %s89 = scalar_select %p86, %s87, %s88
      %p92 = pneg %p86
      %p93 = scmp.eq.s32.totalorder %s9, 1
      %p94 = por %p92, %p93
      %p95 = scmp.ne.s32.totalorder %s87, %s90
      %p96 = scmp.eq.s32.totalorder %s9, 0
      %p97 = por %p95, %p96
      %p98 = scmp.ne.s32.totalorder %s87, %s90
      %p99 = scmp.eq.s32.totalorder %s14, 1
      %p100 = por %p98, %p99
      %p101 = scmp.ne.s32.totalorder %s90, %s91
      %p102 = scmp.eq.s32.totalorder %s14, 0
      %p103 = por %p101, %p102
      %p104 = scmp.ne.s32.totalorder %s90, %s91
      %p105 = scmp.eq.s32.totalorder %s15, 1
      %p106 = por %p104, %p105
      %p108 = scmp.ne.s32.totalorder %s91, %s107
      %p109 = scmp.eq.s32.totalorder %s15, 0
      %p110 = por %p108, %p109
      %p111 = scmp.le.s32.totalorder 1, %s9
      %p112 = scmp.lt.s32.totalorder %s9, 3
      %p113 = pnand %p111, %p112
      %p114 = pneg %p113
      // Predicated region
      $region9: #{tpu_custom_call.1} parent=5 // pred_check
        _
      $region10: #{tpu_custom_call.1} parent=5 // pred_check_branch
        %116 = sbr.rel (%p113) target = $region12
      $region11: #{tpu_custom_call.1} parent=5 // pred_region
        %s117 = ssub.s32 %s9, 1
        // Predicated region
        $region13: #{tpu_custom_call.1} parent=11 // pred_check
          %p118 = pneg %p56
        $region14: #{tpu_custom_call.1} parent=11 // pred_check_branch
          %120 = sbr.rel (%p118) target = $region16
        $region15: #{tpu_custom_call.1} parent=11 // pred_region
          _
        $region16: #{tpu_custom_call.1} parent=11 // pred_fallthru
          _
        // Predicated region
        $region17: #{tpu_custom_call.1} parent=11 // pred_check
          %p121 = pneg %p77
        $region18: #{tpu_custom_call.1} parent=11 // pred_check_branch
          %123 = sbr.rel (%p121) target = $region20
        $region19: #{tpu_custom_call.1} parent=11 // pred_region
          _
        $region20: #{tpu_custom_call.1} parent=11 // pred_fallthru
          _
      $region12: #{tpu_custom_call.1} parent=5 // pred_fallthru
        _
      %p124 = scmp.lt.s32.totalorder %s9, 2
      // Predicated region
      $region21: #{tpu_custom_call.1} parent=5 // pred_check
        %p125 = pneg %p124
      $region22: #{tpu_custom_call.1} parent=5 // pred_check_branch
        %127 = sbr.rel (%p125) target = $region24
      $region23: #{tpu_custom_call.1} parent=5 // pred_region
        // Predicated region
        $region25: #{tpu_custom_call.1} parent=23 // pred_check
          %p128 = pneg %p29
        $region26: #{tpu_custom_call.1} parent=23 // pred_check_branch
          %130 = sbr.rel (%p128) target = $region28
        $region27: #{tpu_custom_call.1} parent=23 // pred_region
          %s131 = smul.u32 13, %s9
          %s132 = ssub.s32 25, %s131
          %p133 = scmp.lt.s32.totalorder %s132, 13
          %s134 = scalar_select %p133, %s132, 13
          %s135 = smul.u32 128, %s134
          %p136 = scmp.lt.s32.totalorder %s131, 24
          %s137 = scalar_select %p136, %s131, 24
          %s138 = smul.addr %s137, 8
          %s139 = scalar_lea.vmem %s0, %s138
          %s140 = smul.u32 13, %s9
          %s141 = ssub.s32 25, %s140
          %p142 = scmp.lt.s32.totalorder %s141, 13
          %s143 = scalar_select %p142, %s141, 13
          %s144 = smul.u32 128, %s143
        $region28: #{tpu_custom_call.1} parent=23 // pred_fallthru
          _
      $region24: #{tpu_custom_call.1} parent=5 // pred_fallthru
        _
      %p145 = scmp.le.s32.totalorder 1, %s9
      %p146 = scmp.lt.s32.totalorder %s9, 3
      %p147 = pnand %p145, %p146
      %p148 = pneg %p147
      // Predicated region
      $region29: #{tpu_custom_call.1} parent=5 // pred_check
        _
      $region30: #{tpu_custom_call.1} parent=5 // pred_check_branch
        %150 = sbr.rel (%p147) target = $region32
      $region31: #{tpu_custom_call.1} parent=5 // pred_region
        %s151 = ssub.s32 %s9, 1
        %s152 = smul.u32 13, %s14
        %s153 = ssub.s32 25, %s152
        %p154 = scmp.lt.s32.totalorder %s153, 13
        %s155 = scalar_select %p154, %s153, 13
        %s156 = smul.u32 128, %s155
        %p157 = scmp.lt.s32.totalorder %s152, 24
        %s158 = scalar_select %p157, %s152, 24
        %s159 = smul.addr %s158, 8
        %s160 = scalar_lea.vmem %s0, %s159
        %p161 = pneg %p35
        %p162 = pneg %p32
        %p163 = pneg %p56
        %p164 = pneg %p53
        %p165 = pneg %p77
        %p166 = pneg %p74
        %p167 = pneg %p103
        %p168 = pneg %p100
        %s169 = sand.u32 %s90, 1
        %s170 = sand.u32 %s90, 1
        %s171 = smul.addr %s170, 104
        %s172 = scalar_lea.vmem [#allocation2], %s171
        %s173 = smul.u32 13, %s14
        %s174 = ssub.s32 25, %s173
        %p175 = scmp.lt.s32.totalorder %s174, 13
        %s176 = scalar_select %p175, %s174, 13
        %s177 = smul.u32 128, %s176
        %p178 = scmp.lt.s32.totalorder %s173, 24
        %s179 = scalar_select %p178, %s173, 24
        %s180 = smul.addr %s179, 8
        %s181 = scalar_lea.vmem %s0, %s180
        %s182 = smul.u32 13, %s14
        %s183 = ssub.s32 25, %s182
        %p184 = scmp.lt.s32.totalorder %s183, 13
        %s185 = scalar_select %p184, %s183, 13
        %s186 = smul.u32 128, %s185
        %s187 = smul.u32 13, %s14
        %s188 = ssub.s32 25, %s187
        %p189 = scmp.lt.s32.totalorder %s188, 13
        %s190 = scalar_select %p189, %s188, 13
        %s191 = smul.u32 128, %s190
        %v192 = vld [vmem:[%s181] sm:$0xff]
        %v193 = vld [vmem:[%s181 + $0x8] sm:$0xff]
        %v194 = vld [vmem:[%s181 + $0x10] sm:$0xff]
        %v195 = vld [vmem:[%s181 + $0x18] sm:$0xff]
        %v196 = vld [vmem:[%s181 + $0x20] sm:$0xff]
        %v197 = vld [vmem:[%s181 + $0x28] sm:$0xff]
        %v198 = vld [vmem:[%s181 + $0x30] sm:$0xff]
        %v199 = vld [vmem:[%s181 + $0x38] sm:$0xff]
        %v200 = vld [vmem:[%s181 + $0x40] sm:$0xff]
        %v201 = vld [vmem:[%s181 + $0x48] sm:$0xff]
        %v202 = vld [vmem:[%s181 + $0x50] sm:$0xff]
        %v203 = vld [vmem:[%s181 + $0x58] sm:$0xff]
        %v204 = vld [vmem:[%s181 + $0x60] sm:$0xff]
        %v205 = vld [vmem:[%s1] sm:$0xff]
        %v206 = vld [vmem:[%s1 + $0x8] sm:$0xff]
        %v207 = vld [vmem:[%s1 + $0x10] sm:$0xff]
        %v208 = vld [vmem:[%s1 + $0x18] sm:$0xff]
        %v209 = vld [vmem:[%s2] sm:$0x1]
        %v211 = vlaneseq
        %v212 = vshrl.u32 %v211, 7
        %v213 = vsub.s32 0, %v212
        %v214 = vrot.slane %v209, %v213
        %vm216 = vcmask 261120
        %v218 = vsel %vm216, %v192, 0
        %v221 = vsel %vm216, %v193, 0
        %v224 = vsel %vm216, %v194, 0
        %v227 = vsel %vm216, %v195, 0
        %v230 = vsel %vm216, %v196, 0
        %v233 = vsel %vm216, %v197, 0
        %v236 = vsel %vm216, %v198, 0
        %v239 = vsel %vm216, %v199, 0
        %v242 = vsel %vm216, %v200, 0
        %v245 = vsel %vm216, %v201, 0
        %v248 = vsel %vm216, %v202, 0
        %v251 = vsel %vm216, %v203, 0
        %v254 = vsel %vm216, %v204, 0
        %256 = vmatprep.subr.mxu0 0.0
        %257 = vmatpush1.msra.mxu0 %v205
        %258 = vmatprep.subr.mxu0 0.0
        %259 = vmatpush1.msra.mxu0 %v206
        %260 = vmatprep.subr.mxu0 0.0
        %261 = vmatpush1.msra.mxu0 %v207
        %262 = vmatprep.subr.mxu0 0.0
        %263 = vmatpush1.msra.mxu0 %v208
        %264 = vmatprep.subr.mxu0 0.0
        %265 = vmatpush1.msra.mxu0 0.0
        %266 = vmatprep.subr.mxu0 0.0
        %267 = vmatpush1.msra.mxu0 0.0
        %268 = vmatprep.subr.mxu0 0.0
        %269 = vmatpush1.msra.mxu0 0.0
        %270 = vmatprep.subr.mxu0 0.0
        %271 = vmatpush1.msra.mxu0 0.0
        %272 = vmatprep.subr.mxu0 0.0
        %273 = vmatpush1.msra.mxu0 0.0
        %274 = vmatprep.subr.mxu0 0.0
        %275 = vmatpush1.msra.mxu0 0.0
        %276 = vmatprep.subr.mxu0 0.0
        %277 = vmatpush1.msra.mxu0 0.0
        %278 = vmatprep.subr.mxu0 0.0
        %279 = vmatpush1.msra.mxu0 0.0
        %280 = vmatprep.subr.mxu0 0.0
        %281 = vmatpush1.msra.mxu0 0.0
        %282 = vmatprep.subr.mxu0 0.0
        %283 = vmatpush1.msra.mxu0 0.0
        %284 = vmatprep.subr.mxu0 0.0
        %285 = vmatpush1.msra.mxu0 0.0
        %286 = vmatprep.subr.mxu0 0.0
        %287 = vmatpush1.msra.mxu0 0.0
        %288 = vmatprep.subr.mxu0 0.0
        %289 = vmatpush1.msra.mxu0 0.0
        %290 = vmatprep.subr.mxu0 0.0
        %291 = vmatpush1.msra.mxu0 0.0
        %292 = vmatprep.subr.mxu0 0.0
        %293 = vmatpush1.msra.mxu0 0.0
        %294 = vmatprep.subr.mxu0 0.0
        %295 = vmatpush1.msra.mxu0 0.0
        %296 = vmatprep.subr.mxu0 0.0
        %297 = vmatpush1.msra.mxu0 0.0
        %298 = vmatprep.subr.mxu0 0.0
        %299 = vmatpush1.msra.mxu0 0.0
        %300 = vmatprep.subr.mxu0 0.0
        %301 = vmatpush1.msra.mxu0 0.0
        %302 = vmatprep.subr.mxu0 0.0
        %303 = vmatpush1.msra.mxu0 0.0
        %304 = vmatprep.subr.mxu0 0.0
        %305 = vmatpush1.msra.mxu0 0.0
        %306 = vmatprep.subr.mxu0 0.0
        %307 = vmatpush1.msra.mxu0 0.0
        %308 = vmatprep.subr.mxu0 0.0
        %309 = vmatpush1.msra.mxu0 0.0
        %310 = vmatprep.subr.mxu0 0.0
        %311 = vmatpush1.msra.mxu0 0.0
        %312 = vmatprep.subr.mxu0 0.0
        %313 = vmatpush1.msra.mxu0 0.0
        %314 = vmatprep.subr.mxu0 0.0
        %315 = vmatpush1.msra.mxu0 0.0
        %316 = vmatprep.subr.mxu0 0.0
        %317 = vmatpush1.msra.mxu0 0.0
        %318 = vmatprep.subr.mxu0 0.0
        %319 = vmatpush1.msra.mxu0 0.0
        %320 = vmatprep.mubr.f32.mxu0 0.0
        %321 = vmatmul.mubr.f32.gmra.mrb[0].mxu0 %v218
        %v322 = vpop.f32.mrb[0].mxu0
        %v323 = vadd.f32 %v214, %v322
        %v324 = vpop.f32.mrb[0].mxu0
        %325 = vmatprep.mubr.f32.mxu0 0.0
        %326 = vmatmul.mubr.f32.gmra.mrb[0].mxu0 %v221
        %v327 = vpop.f32.mrb[0].mxu0
        %v328 = vadd.f32 %v214, %v327
        %v329 = vpop.f32.mrb[0].mxu0
        %330 = vmatprep.mubr.f32.mxu0 0.0
        %331 = vmatmul.mubr.f32.gmra.mrb[0].mxu0 %v224
        %v332 = vpop.f32.mrb[0].mxu0
        %v333 = vadd.f32 %v214, %v332
        %v334 = vpop.f32.mrb[0].mxu0
        %335 = vmatprep.mubr.f32.mxu0 0.0
        %336 = vmatmul.mubr.f32.gmra.mrb[0].mxu0 %v227
        %v337 = vpop.f32.mrb[0].mxu0
        %v338 = vadd.f32 %v214, %v337
        %v339 = vpop.f32.mrb[0].mxu0
        %340 = vmatprep.mubr.f32.mxu0 0.0
        %341 = vmatmul.mubr.f32.gmra.mrb[0].mxu0 %v230
        %v342 = vpop.f32.mrb[0].mxu0
        %v343 = vadd.f32 %v214, %v342
        %v344 = vpop.f32.mrb[0].mxu0
        %345 = vmatprep.mubr.f32.mxu0 0.0
        %346 = vmatmul.mubr.f32.gmra.mrb[0].mxu0 %v233
        %v347 = vpop.f32.mrb[0].mxu0
        %v348 = vadd.f32 %v214, %v347
        %v349 = vpop.f32.mrb[0].mxu0
        %350 = vmatprep.mubr.f32.mxu0 0.0
        %351 = vmatmul.mubr.f32.gmra.mrb[0].mxu0 %v236
        %v352 = vpop.f32.mrb[0].mxu0
        %v353 = vadd.f32 %v214, %v352
        %v354 = vpop.f32.mrb[0].mxu0
        %355 = vmatprep.mubr.f32.mxu0 0.0
        %356 = vmatmul.mubr.f32.gmra.mrb[0].mxu0 %v239
        %v357 = vpop.f32.mrb[0].mxu0
        %v358 = vadd.f32 %v214, %v357
        %v359 = vpop.f32.mrb[0].mxu0
        %360 = vmatprep.mubr.f32.mxu0 0.0
        %361 = vmatmul.mubr.f32.gmra.mrb[0].mxu0 %v242
        %v362 = vpop.f32.mrb[0].mxu0
        %v363 = vadd.f32 %v214, %v362
        %v364 = vpop.f32.mrb[0].mxu0
        %365 = vmatprep.mubr.f32.mxu0 0.0
        %366 = vmatmul.mubr.f32.gmra.mrb[0].mxu0 %v245
        %v367 = vpop.f32.mrb[0].mxu0
        %v368 = vadd.f32 %v214, %v367
        %v369 = vpop.f32.mrb[0].mxu0
        %370 = vmatprep.mubr.f32.mxu0 0.0
        %371 = vmatmul.mubr.f32.gmra.mrb[0].mxu0 %v248
        %v372 = vpop.f32.mrb[0].mxu0
        %v373 = vadd.f32 %v214, %v372
        %v374 = vpop.f32.mrb[0].mxu0
        %375 = vmatprep.mubr.f32.mxu0 0.0
        %376 = vmatmul.mubr.f32.gmra.mrb[0].mxu0 %v251
        %v377 = vpop.f32.mrb[0].mxu0
        %v378 = vadd.f32 %v214, %v377
        %v379 = vpop.f32.mrb[0].mxu0
        %380 = vmatprep.mubr.f32.mxu0 0.0
        %381 = vmatmul.mubr.f32.gmra.mrb[0].mxu0 %v254
        %v382 = vpop.f32.mrb[0].mxu0
        %v383 = vadd.f32 %v214, %v382
        %v384 = vpop.f32.mrb[0].mxu0
        %385 = vdwg.mxu0
        %vm386 = vcmask 64512
        %387 = vst.msk [vmem:[%s172] sm:$0xff] %vm386, %v323
        %388 = vst.msk [vmem:[%s172 + $0x8] sm:$0xff] %vm386, %v328
        %389 = vst.msk [vmem:[%s172 + $0x10] sm:$0xff] %vm386, %v333
        %390 = vst.msk [vmem:[%s172 + $0x18] sm:$0xff] %vm386, %v338
        %391 = vst.msk [vmem:[%s172 + $0x20] sm:$0xff] %vm386, %v343
        %392 = vst.msk [vmem:[%s172 + $0x28] sm:$0xff] %vm386, %v348
        %393 = vst.msk [vmem:[%s172 + $0x30] sm:$0xff] %vm386, %v353
        %394 = vst.msk [vmem:[%s172 + $0x38] sm:$0xff] %vm386, %v358
        %395 = vst.msk [vmem:[%s172 + $0x40] sm:$0xff] %vm386, %v363
        %396 = vst.msk [vmem:[%s172 + $0x48] sm:$0xff] %vm386, %v368
        %397 = vst.msk [vmem:[%s172 + $0x50] sm:$0xff] %vm386, %v373
        %398 = vst.msk [vmem:[%s172 + $0x58] sm:$0xff] %vm386, %v378
        %399 = vst.msk [vmem:[%s172 + $0x60] sm:$0xff] %vm386, %v383
        %s400 = sand.u32 %s90, 1
        %s401 = sand.u32 %s90, 1
        %s402 = smul.addr %s401, 104
        %s403 = scalar_lea.vmem [#allocation2], %s402
        // Predicated region
        $region33: #{tpu_custom_call.1} parent=31 // pred_check
          %p404 = pneg %p100
        $region34: #{tpu_custom_call.1} parent=31 // pred_check_branch
          %406 = sbr.rel (%p404) target = $region36
        $region35: #{tpu_custom_call.1} parent=31 // pred_region
          %s407 = smul.u32 13, %s14
          %s408 = ssub.s32 25, %s407
          %p409 = scmp.lt.s32.totalorder %s408, 13
          %s410 = scalar_select %p409, %s408, 13
          %s411 = smul.u32 128, %s410
          %p412 = scmp.ne.s32.totalorder 0, %s411
          %s413 = smul.addr %s407, 8
          %s414 = scalar_lea.vmem %s3, %s413
          // Predicated region
          $region37: #{tpu_custom_call.1} parent=35 // pred_check
            %p415 = pneg %p412
          $region38: #{tpu_custom_call.1} parent=35 // pred_check_branch
            %417 = sbr.rel (%p415) target = $region40
          $region39: #{tpu_custom_call.1} parent=35 // pred_region
            // Predicated region
            $region41: #{tpu_custom_call.1} parent=39 // pred_check
              _
            $region42: #{tpu_custom_call.1} parent=39 // pred_check_branch
              %419 = sbr.rel (0) target = $region44
            $region43: #{tpu_custom_call.1} parent=39 // pred_region
              // Predicated region
              $region63: #{tpu_custom_call.1} parent=43 // pred_check
                _
              $region64: #{tpu_custom_call.1} parent=43 // pred_check_branch
                %493 = sbr.rel (0) target = $region66
              $region65: #{tpu_custom_call.1} parent=43 // pred_region
                %s494 = sdiv.u32.pop %s410, 13
                %s495 = srem.u32.pop %s410, 13
                // While loop
                $region67: #{tpu_custom_call.1} parent=65 // loop_pre_header
                  _
                $region68: #{tpu_custom_call.1} parent=65 // loop_header
                  %s497 = sphi 0, %s499
                  %p498 = scmp.ge.s32.totalorder %s497, %s494
                  %s502 = sphi 0, %s533
                  %s503 = sphi %s403, %s536
                  %s504 = sphi %s414, %s537
                $region69: #{tpu_custom_call.1} parent=65 // loop_header_branch
                  %501 = sbr.rel (%p498) target = $region73
                $region70: #{tpu_custom_call.1} parent=65 // loop_body
                  %v505 = vld [vmem:[%s503] sm:$0xff]
                  %506 = vst [vmem:[%s504] sm:$0xff] %v505
                  %v507 = vld [vmem:[%s503 + $0x8] sm:$0xff]
                  %508 = vst [vmem:[%s504 + $0x8] sm:$0xff] %v507
                  %v509 = vld [vmem:[%s503 + $0x10] sm:$0xff]
                  %510 = vst [vmem:[%s504 + $0x10] sm:$0xff] %v509
                  %v511 = vld [vmem:[%s503 + $0x18] sm:$0xff]
                  %512 = vst [vmem:[%s504 + $0x18] sm:$0xff] %v511
                  %v513 = vld [vmem:[%s503 + $0x20] sm:$0xff]
                  %514 = vst [vmem:[%s504 + $0x20] sm:$0xff] %v513
                  %v515 = vld [vmem:[%s503 + $0x28] sm:$0xff]
                  %516 = vst [vmem:[%s504 + $0x28] sm:$0xff] %v515
                  %v517 = vld [vmem:[%s503 + $0x30] sm:$0xff]
                  %518 = vst [vmem:[%s504 + $0x30] sm:$0xff] %v517
                  %v519 = vld [vmem:[%s503 + $0x38] sm:$0xff]
                  %520 = vst [vmem:[%s504 + $0x38] sm:$0xff] %v519
                  %v521 = vld [vmem:[%s503 + $0x40] sm:$0xff]
                  %522 = vst [vmem:[%s504 + $0x40] sm:$0xff] %v521
                  %v523 = vld [vmem:[%s503 + $0x48] sm:$0xff]
                  %524 = vst [vmem:[%s504 + $0x48] sm:$0xff] %v523
                  %v525 = vld [vmem:[%s503 + $0x50] sm:$0xff]
                  %526 = vst [vmem:[%s504 + $0x50] sm:$0xff] %v525
                  %v527 = vld [vmem:[%s503 + $0x58] sm:$0xff]
                  %528 = vst [vmem:[%s504 + $0x58] sm:$0xff] %v527
                  %v529 = vld [vmem:[%s503 + $0x60] sm:$0xff]
                  %530 = vst [vmem:[%s504 + $0x60] sm:$0xff] %v529
                  %s531 = sadd.s32 1, %s502
                  %p532 = scmp.ge.s32.totalorder %s531, %s494
                  %s533 = scalar_select %p532, 0, %s531
                  %s534 = smul.u32 %s533, 104
                  %s535 = smul.u32 %s533, 104
                  %s536 = scalar_lea.vmem %s403, %s534 [#allocation2]
                  %s537 = scalar_lea.vmem %s414, %s535
                $region71: #{tpu_custom_call.1} parent=65 // loop_footer
                  %s499 = sadd.s32 %s497, 1
                $region72: #{tpu_custom_call.1} parent=65 // loop_footer_branch
                  %496 = sbr.rel target = $region68
                $region73: #{tpu_custom_call.1} parent=65 // loop_exit
                  _
                %s538 = sdiv.u32.pop %s410, 13
                %s539 = srem.u32.pop %s410, 13
                %s540 = smul.u32 %s538, 13
                %s541 = smul.u32 8, %s540
                %s542 = scalar_lea.vmem %s403, %s541 [#allocation2]
                %s543 = smul.u32 8, %s540
                %s544 = scalar_lea.vmem %s414, %s543
                // While loop
                $region74: #{tpu_custom_call.1} parent=65 // loop_pre_header
                  _
                $region75: #{tpu_custom_call.1} parent=65 // loop_header
                  %s546 = sphi 0, %s548
                  %p547 = scmp.ge.s32.totalorder %s546, %s539
                  %s551 = sphi 0, %s558
                  %s552 = sphi %s542, %s561
                  %s553 = sphi %s544, %s562
                $region76: #{tpu_custom_call.1} parent=65 // loop_header_branch
                  %550 = sbr.rel (%p547) target = $region80
                $region77: #{tpu_custom_call.1} parent=65 // loop_body
                  %v554 = vld [vmem:[%s552] sm:$0xff]
                  %555 = vst [vmem:[%s553] sm:$0xff] %v554
                  %s556 = sadd.s32 1, %s551
                  %p557 = scmp.ge.s32.totalorder %s556, %s539
                  %s558 = scalar_select %p557, 0, %s556
                  %s559 = smul.u32 %s558, 8
                  %s560 = smul.u32 %s558, 8
                  %s561 = scalar_lea.vmem %s542, %s559 [#allocation2]
                  %s562 = scalar_lea.vmem %s544, %s560
                $region78: #{tpu_custom_call.1} parent=65 // loop_footer
                  %s548 = sadd.s32 %s546, 1
                $region79: #{tpu_custom_call.1} parent=65 // loop_footer_branch
                  %545 = sbr.rel target = $region75
                $region80: #{tpu_custom_call.1} parent=65 // loop_exit
                  _
              $region66: #{tpu_custom_call.1} parent=43 // pred_fallthru
                _
              // Predicated region
              $region81: #{tpu_custom_call.1} parent=43 // pred_check
                _
              $region82: #{tpu_custom_call.1} parent=43 // pred_check_branch
                %564 = sbr.rel target = $region84
              $region83: #{tpu_custom_call.1} parent=43 // pred_region
                _
              $region84: #{tpu_custom_call.1} parent=43 // pred_fallthru
                _
            $region44: #{tpu_custom_call.1} parent=39 // pred_fallthru
              _
            // Predicated region
            $region45: #{tpu_custom_call.1} parent=39 // pred_check
              _
            $region46: #{tpu_custom_call.1} parent=39 // pred_check_branch
              %421 = sbr.rel target = $region48
            $region47: #{tpu_custom_call.1} parent=39 // pred_region
              %s423 = sdiv.u32.pop %s410, 13
              %s424 = srem.u32.pop %s410, 13
              // While loop
              $region49: #{tpu_custom_call.1} parent=47 // loop_pre_header
                _
              $region50: #{tpu_custom_call.1} parent=47 // loop_header
                %s426 = sphi 0, %s428
                %p427 = scmp.ge.s32.totalorder %s426, %s423
                %s431 = sphi 0, %s462
                %s432 = sphi %s403, %s465
                %s433 = sphi %s414, %s466
              $region51: #{tpu_custom_call.1} parent=47 // loop_header_branch
                %430 = sbr.rel (%p427) target = $region55
              $region52: #{tpu_custom_call.1} parent=47 // loop_body
                %v434 = vld [vmem:[%s432] sm:$0xff]
                %435 = vst [vmem:[%s433] sm:$0xff] %v434
                %v436 = vld [vmem:[%s432 + $0x8] sm:$0xff]
                %437 = vst [vmem:[%s433 + $0x8] sm:$0xff] %v436
                %v438 = vld [vmem:[%s432 + $0x10] sm:$0xff]
                %439 = vst [vmem:[%s433 + $0x10] sm:$0xff] %v438
                %v440 = vld [vmem:[%s432 + $0x18] sm:$0xff]
                %441 = vst [vmem:[%s433 + $0x18] sm:$0xff] %v440
                %v442 = vld [vmem:[%s432 + $0x20] sm:$0xff]
                %443 = vst [vmem:[%s433 + $0x20] sm:$0xff] %v442
                %v444 = vld [vmem:[%s432 + $0x28] sm:$0xff]
                %445 = vst [vmem:[%s433 + $0x28] sm:$0xff] %v444
                %v446 = vld [vmem:[%s432 + $0x30] sm:$0xff]
                %447 = vst [vmem:[%s433 + $0x30] sm:$0xff] %v446
                %v448 = vld [vmem:[%s432 + $0x38] sm:$0xff]
                %449 = vst [vmem:[%s433 + $0x38] sm:$0xff] %v448
                %v450 = vld [vmem:[%s432 + $0x40] sm:$0xff]
                %451 = vst [vmem:[%s433 + $0x40] sm:$0xff] %v450
                %v452 = vld [vmem:[%s432 + $0x48] sm:$0xff]
                %453 = vst [vmem:[%s433 + $0x48] sm:$0xff] %v452
                %v454 = vld [vmem:[%s432 + $0x50] sm:$0xff]
                %455 = vst [vmem:[%s433 + $0x50] sm:$0xff] %v454
                %v456 = vld [vmem:[%s432 + $0x58] sm:$0xff]
                %457 = vst [vmem:[%s433 + $0x58] sm:$0xff] %v456
                %v458 = vld [vmem:[%s432 + $0x60] sm:$0xff]
                %459 = vst [vmem:[%s433 + $0x60] sm:$0xff] %v458
                %s460 = sadd.s32 1, %s431
                %p461 = scmp.ge.s32.totalorder %s460, %s423
                %s462 = scalar_select %p461, 0, %s460
                %s463 = smul.u32 %s462, 104
                %s464 = smul.u32 %s462, 104
                %s465 = scalar_lea.vmem %s403, %s463 [#allocation2]
                %s466 = scalar_lea.vmem %s414, %s464
              $region53: #{tpu_custom_call.1} parent=47 // loop_footer
                %s428 = sadd.s32 %s426, 1
              $region54: #{tpu_custom_call.1} parent=47 // loop_footer_branch
                %425 = sbr.rel target = $region50
              $region55: #{tpu_custom_call.1} parent=47 // loop_exit
                _
              %s467 = sdiv.u32.pop %s410, 13
              %s468 = srem.u32.pop %s410, 13
              %s469 = smul.u32 %s467, 13
              %s470 = smul.u32 8, %s469
              %s471 = scalar_lea.vmem %s403, %s470 [#allocation2]
              %s472 = smul.u32 8, %s469
              %s473 = scalar_lea.vmem %s414, %s472
              // While loop
              $region56: #{tpu_custom_call.1} parent=47 // loop_pre_header
                _
              $region57: #{tpu_custom_call.1} parent=47 // loop_header
                %s475 = sphi 0, %s477
                %p476 = scmp.ge.s32.totalorder %s475, %s468
                %s480 = sphi 0, %s487
                %s481 = sphi %s471, %s490
                %s482 = sphi %s473, %s491
              $region58: #{tpu_custom_call.1} parent=47 // loop_header_branch
                %479 = sbr.rel (%p476) target = $region62
              $region59: #{tpu_custom_call.1} parent=47 // loop_body
                %v483 = vld [vmem:[%s481] sm:$0xff]
                %484 = vst [vmem:[%s482] sm:$0xff] %v483
                %s485 = sadd.s32 1, %s480
                %p486 = scmp.ge.s32.totalorder %s485, %s468
                %s487 = scalar_select %p486, 0, %s485
                %s488 = smul.u32 %s487, 8
                %s489 = smul.u32 %s487, 8
                %s490 = scalar_lea.vmem %s471, %s488 [#allocation2]
                %s491 = scalar_lea.vmem %s473, %s489
              $region60: #{tpu_custom_call.1} parent=47 // loop_footer
                %s477 = sadd.s32 %s475, 1
              $region61: #{tpu_custom_call.1} parent=47 // loop_footer_branch
                %474 = sbr.rel target = $region57
              $region62: #{tpu_custom_call.1} parent=47 // loop_exit
                _
            $region48: #{tpu_custom_call.1} parent=39 // pred_fallthru
              _
          $region40: #{tpu_custom_call.1} parent=35 // pred_fallthru
            _
          %565 = vnop
        $region36: #{tpu_custom_call.1} parent=31 // pred_fallthru
          _
      $region32: #{tpu_custom_call.1} parent=5 // pred_fallthru
        _
      %p566 = scmp.le.s32.totalorder 2, %s9
      // Predicated region
      $region85: #{tpu_custom_call.1} parent=5 // pred_check
        %p567 = pneg %p566
      $region86: #{tpu_custom_call.1} parent=5 // pred_check_branch
        %569 = sbr.rel (%p567) target = $region88
      $region87: #{tpu_custom_call.1} parent=5 // pred_region
        %s570 = ssub.s32 %s9, 2
        // Predicated region
        $region89: #{tpu_custom_call.1} parent=87 // pred_check
          %p571 = pneg %p106
        $region90: #{tpu_custom_call.1} parent=87 // pred_check_branch
          %573 = sbr.rel (%p571) target = $region92
        $region91: #{tpu_custom_call.1} parent=87 // pred_region
          %s574 = sand.u32 %s91, 1
          %s575 = sand.u32 %s91, 1
          %s576 = smul.addr %s575, 104
          %s577 = scalar_lea.vmem [#allocation2], %s576
        $region92: #{tpu_custom_call.1} parent=87 // pred_fallthru
          _
      $region88: #{tpu_custom_call.1} parent=5 // pred_fallthru
        _
    $region6: #{tpu_custom_call.1} parent=1 // loop_footer
      %s13 = sadd.s32 1, %s9
    $region7: #{tpu_custom_call.1} parent=1 // loop_footer_branch
      %8 = sbr.rel target = $region3
    $region8: #{tpu_custom_call.1} parent=1 // loop_exit
      _

</llo_original>
